<compile_context>
chip_gen: v5e
topology: v5e:2x2
jax: 0.10.0
libtpu: 0.0.40
codegen_flags: <defaults>
</compile_context>

<pallas_src>
import functools

import jax
import jax.numpy as jnp
from jax.experimental import pallas as pl
from jax.experimental.pallas import tpu as pltpu

_LANE = 128


def _cdiv(a, b):
    return -(-a // b)


def _round_up(a, m):
    return _cdiv(a, m) * m


@functools.lru_cache(maxsize=None)
def _tpu_budget():
    """(target_block_bytes, vmem_limit_bytes), generation-gated.

    v7x has 64 MiB VMEM/TC (32 MiB default scoped limit): stay at 4 MiB blocks
    so double-buffered in+out (4x block) fits in 16 MiB.  v5e/v6e (128 MiB
    VMEM) get roomier 8 MiB blocks with an explicit 48 MiB limit (v5e's
    default scoped limit is only 16 MiB, so the explicit limit matters).
    """
    vmem_cap = None
    try:
        vmem_cap = getattr(pltpu.get_tpu_info(), "vmem_capacity_bytes", None)
    except Exception:
        vmem_cap = None
    if vmem_cap is not None and vmem_cap >= 100 * 1024 * 1024:
        return 8 * 1024 * 1024, 48 * 1024 * 1024
    return 4 * 1024 * 1024, 32 * 1024 * 1024


def _min_steps(total_bytes):
    # >= 4 (even) steps once the tensor is large enough that pipelining
    # overlap matters and so both v7x TensorCores get >= 2 blocks each;
    # >= 2 steps for medium tensors; 1 step for tiny ones (per-step overhead
    # ~0.35 us would dominate).
    if total_bytes >= (1 << 20):
        return 4
    if total_bytes >= (256 << 10):
        return 2
    return 1


def _h_sigmoid_kernel(x_ref, o_ref):
    # ReLU6(x + 3) / 6, computed in f32 (free: the op is HBM-bound) and cast
    # back to the output dtype on the store.
    x = x_ref[...].astype(jnp.float32)
    y = jnp.minimum(jnp.maximum(x + 3.0, 0.0), 6.0) * (1.0 / 6.0)
    o_ref[...] = y.astype(o_ref.dtype)


def _run_2d(x2d, tile_rows, vmem_limit, donate):
    rows, lane = x2d.shape
    grid = (_cdiv(rows, tile_rows),)
    return pl.pallas_call(
        _h_sigmoid_kernel,
        out_shape=jax.ShapeDtypeStruct((rows, lane), x2d.dtype),
        grid_spec=pltpu.PrefetchScalarGridSpec(
            num_scalar_prefetch=0,
            grid=grid,
            in_specs=[pl.BlockSpec((tile_rows, lane), lambda i: (i, 0))],
            out_specs=pl.BlockSpec((tile_rows, lane), lambda i: (i, 0)),
        ),
        compiler_params=pltpu.CompilerParams(
            dimension_semantics=("parallel",),
            vmem_limit_bytes=vmem_limit,
        ),
        input_output_aliases={0: 0} if donate else {},
    )(x2d)


def _run_1d(x1d, tile, vmem_limit, donate):
    (n,) = x1d.shape
    grid = (_cdiv(n, tile),)
    return pl.pallas_call(
        _h_sigmoid_kernel,
        out_shape=jax.ShapeDtypeStruct((n,), x1d.dtype),
        grid_spec=pltpu.PrefetchScalarGridSpec(
            num_scalar_prefetch=0,
            grid=grid,
            in_specs=[pl.BlockSpec((tile,), lambda i: (i,))],
            out_specs=pl.BlockSpec((tile,), lambda i: (i,)),
        ),
        compiler_params=pltpu.CompilerParams(
            dimension_semantics=("parallel",),
            vmem_limit_bytes=vmem_limit,
        ),
        input_output_aliases={0: 0} if donate else {},
    )(x1d)


def _pick_tile_rows(rows, itemsize, block_bytes):
    # Packed-sublane multiple: 8 (f32), 16 (bf16/f16), 32 (int8/fp8).
    sub = max(8, 32 // itemsize)
    if rows <= sub:
        return rows  # single full-array block
    bytes_per_row = _LANE * itemsize
    rows_per_block = max(sub, (block_bytes // bytes_per_row) // sub * sub)
    total_bytes = rows * bytes_per_row
    steps = max(_cdiv(rows, rows_per_block), _min_steps(total_bytes))
    return _round_up(_cdiv(rows, steps), sub)


def _pick_tile_1d(n, itemsize, block_bytes):
    chunk = 8 * _LANE  # 1024: keeps the 1-D block a generous multiple of 128
    if n <= chunk:
        return n  # single full-array block
    elems_per_block = max(chunk, (block_bytes // itemsize) // chunk * chunk)
    total_bytes = n * itemsize
    steps = max(_cdiv(n, elems_per_block), _min_steps(total_bytes))
    tile = _round_up(_cdiv(n, steps), chunk)
    return n if tile >= n else tile


def h_sigmoid(x, *, target_block_bytes=None, donate_input=False):
    """Elementwise hard-sigmoid ReLU6(x+3)/6; any shape, same shape/dtype."""
    if not jnp.issubdtype(x.dtype, jnp.floating):
        raise TypeError(f"h_sigmoid expects a floating-point input, got {x.dtype}")
    orig_shape = x.shape
    n = x.size
    if n == 0:
        return x

    block_bytes, vmem_limit = _tpu_budget()
    if target_block_bytes is not None:
        block_bytes = int(target_block_bytes)
    itemsize = x.dtype.itemsize

    if n % _LANE == 0:
        # Lane-aligned fast path: free reshape to a (rows, 128) slab,
        # no pad and no final slice.
        rows = n // _LANE
        tr = _pick_tile_rows(rows, itemsize, block_bytes)
        out2d = _run_2d(x.reshape(rows, _LANE), tr, vmem_limit, donate_input)
        return out2d.reshape(orig_shape)

    # Ragged path: process the flat array directly with a 1-D grid and rely on
    # Pallas boundary masking for the <=127-element tail block.  This avoids
    # the jnp.pad and trailing [:n] slice, each of which was a full extra HBM
    # read+write pass.
    x1d = x.reshape(-1)
    tile = _pick_tile_1d(n, itemsize, block_bytes)
    out1d = _run_1d(x1d, tile, vmem_limit, donate_input)
    return out1d.reshape(orig_shape)


if __name__ == "__main__":
    key = jax.random.PRNGKey(0)
    ks = jax.random.split(key, 6)

    def ref_fn(v):
        v = v.astype(jnp.float32)
        return jnp.minimum(jnp.maximum(v + 3.0, 0.0), 6.0) / 6.0

    # 1) Typical NCHW activation (lane-aligned fast path, single block).
    x1 = jax.random.normal(ks[0], (2, 4, 16, 16), dtype=jnp.float32) * 4.0
    o1 = jax.block_until_ready(h_sigmoid(x1))
    assert o1.shape == x1.shape and o1.dtype == x1.dtype
    assert jnp.max(jnp.abs(o1 - ref_fn(x1))) < 1e-6

    # 2) Ragged element count (single full 1-D block, no pad / no slice).
    x2 = jax.random.normal(ks[1], (3, 5, 7), dtype=jnp.float32) * 4.0
    o2 = jax.block_until_ready(h_sigmoid(x2))
    assert o2.shape == x2.shape and o2.dtype == x2.dtype
    assert jnp.max(jnp.abs(o2 - ref_fn(x2))) < 1e-6

    # 3) Lane-aligned multi-block grid with a masked boundary block
    #    (tile forced small so the cdiv/masking path is exercised cheaply).
    x3 = jax.random.normal(ks[2], (2, 4, 16, 40), dtype=jnp.float32) * 4.0
    o3 = jax.block_until_ready(h_sigmoid(x3, target_block_bytes=16 * 1024))
    assert o3.shape == x3.shape and o3.dtype == x3.dtype
    assert jnp.max(jnp.abs(o3 - ref_fn(x3))) < 1e-6

    # 4) Ragged multi-block 1-D grid with a masked boundary block.
    x4 = jax.random.normal(ks[3], (3, 7, 173), dtype=jnp.float32) * 4.0
    o4 = jax.block_until_ready(h_sigmoid(x4, target_block_bytes=4 * 1024))
    assert o4.shape == x4.shape and o4.dtype == x4.dtype
    assert jnp.max(jnp.abs(o4 - ref_fn(x4))) < 1e-6

    # 5) bf16 input: kernel computes in f32 and casts on the store.
    x5 = (jax.random.normal(ks[4], (2, 8, 16, 16), dtype=jnp.float32) * 4.0).astype(jnp.bfloat16)
    o5 = jax.block_until_ready(h_sigmoid(x5))
    expect5 = ref_fn(x5).astype(jnp.bfloat16)
    assert o5.shape == x5.shape and o5.dtype == jnp.bfloat16
    assert jnp.max(jnp.abs(o5.astype(jnp.float32) - expect5.astype(jnp.float32))) < 1e-2

    # 6) input_output_aliases path (expected value computed before the call).
    x6 = jax.random.normal(ks[5], (2, 4, 16, 16), dtype=jnp.float32) * 4.0
    expect6 = jax.block_until_ready(ref_fn(x6))
    o6 = jax.block_until_ready(h_sigmoid(x6, donate_input=True))
    assert o6.shape == x6.shape and o6.dtype == x6.dtype
    assert jnp.max(jnp.abs(o6 - expect6)) < 1e-6

    print("KERNEL_OK")
</pallas_src>

<mosaic_0001>
module attributes {stable_mosaic.version = 11 : i64} {
  func.func @_h_sigmoid_kernel(%arg0: i32, %arg1: memref<16x128xf32, #tpu.memory_space<vmem>>, %arg2: memref<16x128xf32, #tpu.memory_space<vmem>>) attributes {dimension_semantics = [#tpu.dimension_semantics<parallel>], iteration_bounds = array<i64: 1>, scalar_prefetch = 0 : i64, scratch_operands = 0 : i64, tpu.core_type = #tpu.core_type<tc>, window_params = [{transform_indices = @transform_0, window_bounds = array<i64: 16, 128>}, {transform_indices = @transform_1, window_bounds = array<i64: 16, 128>}]} {
    %c0 = arith.constant 0 : index
    %c0_0 = arith.constant 0 : index
    %0 = vector.load %arg1[%c0, %c0_0] : memref<16x128xf32, #tpu.memory_space<vmem>>, vector<16x128xf32>
    %cst = arith.constant 3.000000e+00 : f32
    %1 = vector.broadcast %cst : f32 to vector<16x128xf32>
    %2 = arith.addf %0, %1 : vector<16x128xf32>
    %cst_1 = arith.constant 0.000000e+00 : f32
    %3 = vector.broadcast %cst_1 : f32 to vector<16x128xf32>
    %4 = arith.maximumf %2, %3 : vector<16x128xf32>
    %cst_2 = arith.constant 6.000000e+00 : f32
    %5 = vector.broadcast %cst_2 : f32 to vector<16x128xf32>
    %6 = arith.minimumf %4, %5 : vector<16x128xf32>
    %cst_3 = arith.constant 0.166666672 : f32
    %7 = vector.broadcast %cst_3 : f32 to vector<16x128xf32>
    %8 = arith.mulf %6, %7 : vector<16x128xf32>
    %c0_4 = arith.constant 0 : index
    %c0_5 = arith.constant 0 : index
    %9 = vector.load %arg2[%c0_4, %c0_5] : memref<16x128xf32, #tpu.memory_space<vmem>>, vector<16x128xf32>
    tpu.vector_store %arg2[%c0_4, %c0_5], %8 {strides = array<i32>} : memref<16x128xf32, #tpu.memory_space<vmem>>, vector<16x128xf32>,
    return
  }
  func.func @transform_0(%arg0: i32) -> (i32, i32) {
    %c0_i32 = arith.constant 0 : i32
    %c0_i32_0 = arith.constant 0 : i32
    return %arg0, %c0_i32 : i32, i32
  }
  func.func @transform_1(%arg0: i32) -> (i32, i32) {
    %c0_i32 = arith.constant 0 : i32
    %c0_i32_0 = arith.constant 0 : i32
    return %arg0, %c0_i32 : i32, i32
  }
}

</mosaic_0001>

<llo_original>
// kernel: tpu_custom_call.1
$region0: #{tpu_custom_call.1}
  #allocation0 [shape = 'u32[]', space=smem, size = 0x4, offset = 0x4, fixed_abs, tag = 'smem constant byte address 0x4 - core index']
  #allocation1 [shape = 'u32[72,128]{1,0:T(1,128)}', space=vmem, size = 0x9000, scoped, tag = 'internal scratch']
  %s0 = inlined_call_operand.hbm [shape: f32[16,128], index: 0, kind: input, shape index: {}]
  %s1 = inlined_call_operand.hbm [shape: f32[16,128], index: 1, kind: output, shape index: {}]
  %s2 = sld [smem:[#allocation0]]
  $region18: #{tpu_custom_call.1} parent=0
    _
  %s4 = ssub.s32 1, %s2
  %s5 = scalar_select 0, %s4, %s2
  $region1: #{tpu_custom_call.1} parent=0
    #allocation2 [shape = 'u8[8192]{0}', space=vmem, size = 0x2000, scoped, tag = 'input window, operand 0, single buffered']
    #allocation3 [shape = 's32[1]{0}', space=sflag, size = 0x4, scoped, tag = 'scoped memory for tpu_custom_call.1']
    #allocation4 [shape = 's32[1]{0}', space=sflag, size = 0x4, scoped, tag = 'scoped memory for tpu_custom_call.1']
    #allocation5 [shape = 'u8[8192]{0}', space=vmem, size = 0x2000, scoped, tag = 'output window, operand 0, single buffered']
    %6 = vsyncpa [#allocation3], 0
    %7 = vsyncpa [#allocation4], 0
    // Predicated region
    $region2: #{tpu_custom_call.1} parent=1 // pred_check
      _
    $region3: #{tpu_custom_call.1} parent=1 // pred_check_branch
      %9 = sbr.rel (0) target = $region5
    $region4: #{tpu_custom_call.1} parent=1 // pred_region
      %11 = vsyncadd [#allocation3], 0
      %s12 = sshll.u32 %s0, 4
      %s13 = int_to_ptr.hbm [resolvable:$true] %s12
      %s14 = sshll.u32 [#allocation2], 4
      %s15 = int_to_ptr.vmem [resolvable:$true] %s14
      %20 = dma.hbm_to_vmem [thread:$0]  %s13, 256, %s15, [#allocation3], 128, 128, 8
    $region5: #{tpu_custom_call.1} parent=1 // pred_fallthru
      _
    // Predicated region
    $region6: #{tpu_custom_call.1} parent=1 // pred_check
      _
    $region7: #{tpu_custom_call.1} parent=1 // pred_check_branch
      %22 = sbr.rel (0) target = $region9
    $region8: #{tpu_custom_call.1} parent=1 // pred_region
      %24 = dma.done [#allocation3], 256
    $region9: #{tpu_custom_call.1} parent=1 // pred_fallthru
      _
    %v25 = vld [vmem:[#allocation2] sm:$0xff]
    %v26 = vld [vmem:[#allocation2 + $0x8] sm:$0xff]
    %v27 = vadd.f32 %v25, 3.0
    %v28 = vadd.f32 %v26, 3.0
    %v29 = vmax.f32 %v27, 0.0
    %v30 = vmax.f32 %v28, 0.0
    %v31 = vmin.f32 %v29, 6.0
    %v32 = vmin.f32 %v30, 6.0
    %v33 = vmul.f32 %v31, 0.16666667
    %v34 = vmul.f32 %v32, 0.16666667
    %35 = vst [vmem:[#allocation5] sm:$0xff] %v33
    %36 = vst [vmem:[#allocation5 + $0x8] sm:$0xff] %v34
    // Predicated region
    $region10: #{tpu_custom_call.1} parent=1 // pred_check
      _
    $region11: #{tpu_custom_call.1} parent=1 // pred_check_branch
      %38 = sbr.rel (0) target = $region13
    $region12: #{tpu_custom_call.1} parent=1 // pred_region
      %40 = vsyncadd [#allocation4], 0
      %s41 = sshll.u32 [#allocation5], 4
      %s42 = int_to_ptr.vmem [resolvable:$true] %s41
      %s43 = sshll.u32 %s1, 4
      %s44 = int_to_ptr.hbm [resolvable:$true] %s43
      %49 = dma.vmem_to_hbm [thread:$0]  %s42, 256, %s44, [#allocation4], 128, 128, 8
    $region13: #{tpu_custom_call.1} parent=1 // pred_fallthru
      _
    // Predicated region
    $region14: #{tpu_custom_call.1} parent=1 // pred_check
      _
    $region15: #{tpu_custom_call.1} parent=1 // pred_check_branch
      %51 = sbr.rel (0) target = $region17
    $region16: #{tpu_custom_call.1} parent=1 // pred_region
      %53 = dma.done [#allocation4], 256
    $region17: #{tpu_custom_call.1} parent=1 // pred_fallthru
      _
    %54 = vsyncpa [#allocation3], 1
    %55 = vsyncpa [#allocation4], 1

</llo_original>
